<compile_context>
chip_gen: v6e
topology: v6e:2x2x1
jax: 0.10.0
libtpu: 0.0.40
codegen_flags: <defaults>
</compile_context>

<pallas_src>
import jax
import jax.numpy as jnp
from jax import lax
from jax.experimental import pallas as pl
from jax.experimental.pallas import tpu as pltpu


def se_kernel(x_ref, w1_ref, w2_ref, o_ref):
    # x_ref: (TB, C, HW) block; w1_ref: (hidden, C); w2_ref: (C, hidden)
    TB, C, HW = x_ref.shape

    x = x_ref[...]                                               # (TB, C, HW), native dtype

    # squeeze: global average pool over the spatial (lane) axis -> (TB, C)
    y = jnp.sum(x.astype(jnp.float32), axis=2) * (1.0 / float(HW))

    # excitation (batched over TB):
    #   h = relu(y @ w1.T)        -> (TB, hidden)
    #   s = sigmoid(h @ w2.T)     -> (TB, C)
    # dot_general contracts on the shared C / hidden axes without materializing
    # a transpose of the weights.
    h = lax.dot_general(y, w1_ref[...], (((1,), (1,)), ((), ())),
                        preferred_element_type=jnp.float32)
    h = jnp.maximum(h, 0.0)
    s = lax.dot_general(h, w2_ref[...], (((1,), (1,)), ((), ())),
                        preferred_element_type=jnp.float32)
    s = jax.nn.sigmoid(s)                                        # (TB, C)

    # scale: per-channel gate broadcast over spatial positions, in input dtype
    o_ref[...] = (x * s.astype(x.dtype)[:, :, None]).astype(o_ref.dtype)


def _choose_batch_tile(B, C, HW, itemsize, budget_bytes):
    """Largest divisor of B whose (input + output) tile fits the byte budget,
    while keeping at least 2 grid steps when B >= 2 (v7x has 2 TensorCores)."""
    per_elem_bytes = 2 * C * HW * itemsize          # input tile + output tile
    max_tb = max(1, budget_bytes // per_elem_bytes)
    if B >= 2:
        max_tb = min(max_tb, B // 2)
    max_tb = max(1, max_tb)
    tb = 1
    for d in range(1, int(max_tb) + 1):
        if B % d == 0:
            tb = d
    return tb


def se_layer(x, w1, w2, *, tile_budget_bytes=2 << 20):
    """x: (B, C, H, W); w1: (C//r, C) [fc1 weight]; w2: (C, C//r) [fc2 weight].
    Bias-free linears, matching nn.Linear(..., bias=False) in the module."""
    B, C, H, W = x.shape
    hidden = w1.shape[0]
    assert w1.shape == (hidden, C) and w2.shape == (C, hidden)

    HW = H * W
    itemsize = jnp.dtype(x.dtype).itemsize

    # Wrapper-side flatten: free metadata change, gives a lane-dense last dim.
    x2 = x.reshape(B, C, HW)

    TB = _choose_batch_tile(B, C, HW, itemsize, tile_budget_bytes)
    grid = (B // TB,)

    cost = pl.CostEstimate(
        flops=2 * B * C * hidden * 2,                 # two tiny matmuls
        transcendentals=B * C,                        # sigmoid
        bytes_accessed=2 * B * C * HW * itemsize
        + (w1.size + w2.size) * jnp.dtype(w1.dtype).itemsize,
    )

    out2 = pl.pallas_call(
        se_kernel,
        out_shape=jax.ShapeDtypeStruct((B, C, HW), x.dtype),
        grid_spec=pltpu.PrefetchScalarGridSpec(
            num_scalar_prefetch=0,
            grid=grid,
            in_specs=[
                pl.BlockSpec((TB, C, HW), lambda b: (b, 0, 0)),
                pl.BlockSpec((hidden, C), lambda b: (0, 0)),
                pl.BlockSpec((C, hidden), lambda b: (0, 0)),
            ],
            out_specs=pl.BlockSpec((TB, C, HW), lambda b: (b, 0, 0)),
        ),
        compiler_params=pltpu.CompilerParams(
            dimension_semantics=("parallel",)),
        cost_estimate=cost,
    )(x2, w1, w2)

    return out2.reshape(B, C, H, W)


def se_layer_ref(x, w1, w2):
    """Pure-JAX reference mirroring the PyTorch forward."""
    y = jnp.mean(x, axis=(2, 3))                     # (B, C)
    y = jnp.maximum(y @ w1.T, 0.0)                   # (B, hidden)
    y = jax.nn.sigmoid(y @ w2.T)                     # (B, C)
    return x * y[:, :, None, None]


if __name__ == "__main__":
    # Module config: channel=32, reduction=16 -> hidden=2 (bias-free linears)
    B, C, H, W = 4, 32, 16, 16
    reduction = 16
    hidden = C // reduction

    key = jax.random.PRNGKey(0)
    kx, k1, k2 = jax.random.split(key, 3)

    x = jax.random.normal(kx, (B, C, H, W), dtype=jnp.float32)
    w1 = jax.random.normal(k1, (hidden, C), dtype=jnp.float32) * 0.1   # fc[0].weight
    w2 = jax.random.normal(k2, (C, hidden), dtype=jnp.float32) * 0.1   # fc[2].weight

    out = jax.block_until_ready(se_layer(x, w1, w2))
    ref = se_layer_ref(x, w1, w2)

    assert out.shape == x.shape
    assert jnp.allclose(out, ref, atol=1e-5, rtol=1e-5), "mismatch vs reference"
    print("KERNEL_OK")
</pallas_src>

<mosaic_0001>
module attributes {stable_mosaic.version = 11 : i64} {
  func.func @se_kernel(%arg0: i32, %arg1: memref<2x32x256xf32, #tpu.memory_space<vmem>>, %arg2: memref<2x32xf32, #tpu.memory_space<vmem>>, %arg3: memref<32x2xf32, #tpu.memory_space<vmem>>, %arg4: memref<2x32x256xf32, #tpu.memory_space<vmem>>) attributes {dimension_semantics = [#tpu.dimension_semantics<parallel>], iteration_bounds = array<i64: 2>, scalar_prefetch = 0 : i64, scratch_operands = 0 : i64, tpu.core_type = #tpu.core_type<tc>, window_params = [{transform_indices = @transform_0, window_bounds = array<i64: 2, 32, 256>}, {pipeline_mode = #tpu.pipeline_mode<synchronous>, transform_indices = @transform_1, window_bounds = array<i64: 2, 32>}, {pipeline_mode = #tpu.pipeline_mode<synchronous>, transform_indices = @transform_2, window_bounds = array<i64: 32, 2>}, {transform_indices = @transform_3, window_bounds = array<i64: 2, 32, 256>}]} {
    %c0 = arith.constant 0 : index
    %c0_0 = arith.constant 0 : index
    %c0_1 = arith.constant 0 : index
    %0 = vector.load %arg1[%c0, %c0_0, %c0_1] : memref<2x32x256xf32, #tpu.memory_space<vmem>>, vector<2x32x256xf32>
    %cst = arith.constant dense<0.000000e+00> : vector<2x32xf32>
    %1 = vector.multi_reduction <add>, %0, %cst [2] : vector<2x32x256xf32> to vector<2x32xf32>
    %cst_2 = arith.constant 3.906250e-03 : f32
    %2 = vector.broadcast %cst_2 : f32 to vector<2x32xf32>
    %3 = arith.mulf %1, %2 : vector<2x32xf32>
    %c0_3 = arith.constant 0 : index
    %c0_4 = arith.constant 0 : index
    %4 = vector.load %arg2[%c0_3, %c0_4] : memref<2x32xf32, #tpu.memory_space<vmem>>, vector<2x32xf32>
    %cst_5 = arith.constant dense<0.000000e+00> : vector<2x2xf32>
    %5 = tpu.matmul %3, %4, %cst_5 {dimension_numbers = #tpu.dot_dimension_numbers<[1], [1], [0], [0], [0, 0, 1, 0], [], []>} : vector<2x32xf32>, vector<2x32xf32>, vector<2x2xf32> -> vector<2x2xf32>
    %cst_6 = arith.constant 0.000000e+00 : f32
    %6 = vector.broadcast %cst_6 : f32 to vector<2x2xf32>
    %7 = arith.maximumf %5, %6 : vector<2x2xf32>
    %c0_7 = arith.constant 0 : index
    %c0_8 = arith.constant 0 : index
    %8 = vector.load %arg3[%c0_7, %c0_8] : memref<32x2xf32, #tpu.memory_space<vmem>>, vector<32x2xf32>
    %cst_9 = arith.constant dense<0.000000e+00> : vector<2x32xf32>
    %9 = tpu.matmul %7, %8, %cst_9 {dimension_numbers = #tpu.dot_dimension_numbers<[1], [1], [0], [0], [0, 0, 1, 0], [], []>} : vector<2x2xf32>, vector<32x2xf32>, vector<2x32xf32> -> vector<2x32xf32>
    %10 = arith.negf %9 : vector<2x32xf32>
    %11 = math.exp %10 : vector<2x32xf32>
    %cst_10 = arith.constant 1.000000e+00 : f32
    %12 = vector.broadcast %cst_10 : f32 to vector<2x32xf32>
    %13 = arith.addf %12, %11 : vector<2x32xf32>
    %14 = arith.divf %12, %13 : vector<2x32xf32>
    %15 = vector.shape_cast %14 : vector<2x32xf32> to vector<2x32x1xf32>
    %16 = vector.broadcast %15 : vector<2x32x1xf32> to vector<2x32x256xf32>
    %17 = arith.mulf %0, %16 : vector<2x32x256xf32>
    %c0_11 = arith.constant 0 : index
    %c0_12 = arith.constant 0 : index
    %c0_13 = arith.constant 0 : index
    %18 = vector.load %arg4[%c0_11, %c0_12, %c0_13] : memref<2x32x256xf32, #tpu.memory_space<vmem>>, vector<2x32x256xf32>
    tpu.vector_store %arg4[%c0_11, %c0_12, %c0_13], %17 {strides = array<i32>} : memref<2x32x256xf32, #tpu.memory_space<vmem>>, vector<2x32x256xf32>,
    return
  }
  func.func @transform_0(%arg0: i32) -> (i32, i32, i32) {
    %c0_i32 = arith.constant 0 : i32
    %c0_i32_0 = arith.constant 0 : i32
    %c0_i32_1 = arith.constant 0 : i32
    return %arg0, %c0_i32, %c0_i32_0 : i32, i32, i32
  }
  func.func @transform_1(%arg0: i32) -> (i32, i32) {
    %c0_i32 = arith.constant 0 : i32
    %c0_i32_0 = arith.constant 0 : i32
    %c0_i32_1 = arith.constant 0 : i32
    return %c0_i32, %c0_i32_0 : i32, i32
  }
  func.func @transform_2(%arg0: i32) -> (i32, i32) {
    %c0_i32 = arith.constant 0 : i32
    %c0_i32_0 = arith.constant 0 : i32
    %c0_i32_1 = arith.constant 0 : i32
    return %c0_i32, %c0_i32_0 : i32, i32
  }
  func.func @transform_3(%arg0: i32) -> (i32, i32, i32) {
    %c0_i32 = arith.constant 0 : i32
    %c0_i32_0 = arith.constant 0 : i32
    %c0_i32_1 = arith.constant 0 : i32
    return %arg0, %c0_i32, %c0_i32_0 : i32, i32, i32
  }
}

</mosaic_0001>

<llo_original>
// kernel: tpu_custom_call.1
$region0: #{tpu_custom_call.1}
  #allocation0 [shape = 'u32[]', space=smem, size = 0x4, offset = 0x4, fixed_abs, tag = 'smem constant byte address 0x4 - core index']
  #allocation1 [shape = 'u32[144,128]{1,0:T(1,128)}', space=vmem, size = 0x12000, scoped, tag = 'internal scratch']
  %s0 = inlined_call_operand.hbm [shape: f32[4,32,256], index: 0, kind: input, shape index: {}]
  %s1 = inlined_call_operand.vmem [shape: f32[2,32], index: 1, kind: input, shape index: {}]
  %s2 = inlined_call_operand.vmem [shape: f32[32,2], index: 2, kind: input, shape index: {}]
  %s3 = inlined_call_operand.hbm [shape: f32[4,32,256], index: 3, kind: output, shape index: {}]
  %s4 = sld [smem:[#allocation0]]
  $region49: #{tpu_custom_call.1} parent=0
    _
  %s6 = ssub.s32 1, %s4
  %s7 = scalar_select 0, %s6, %s4
  $region1: #{tpu_custom_call.1} parent=0
    #allocation2 [shape = 'u8[131072]{0}', space=vmem, size = 0x20000, scoped, tag = 'input window, operand 0']
    #allocation3 [shape = 's32[2]{0}', space=sflag, size = 0x8, scoped, tag = 'scoped memory for tpu_custom_call.1']
    #allocation4 [shape = 's32[2]{0}', space=sflag, size = 0x8, scoped, tag = 'scoped memory for tpu_custom_call.1']
    #allocation5 [shape = 'u8[131072]{0}', space=vmem, size = 0x20000, scoped, tag = 'output window, operand 0']
    %8 = vsyncpa [#allocation3], 0
    %s9 = scalar_lea.sflag [#allocation3], 1
    %10 = vsyncpa %s9, 0
    %11 = vsyncpa [#allocation4], 0
    %s12 = scalar_lea.sflag [#allocation4], 1
    %13 = vsyncpa %s12, 0
    loop: start=0, step=1, limit=4
    $region2: #{tpu_custom_call.1} parent=1 // loop_pre_header
      _
    $region3: #{tpu_custom_call.1} parent=1 // loop_header
      %s15 = sphi 0, %s19
      %p16 = scmp.ge.s32.totalorder %s15, 4
      %s25 = sphi 0, %s27
      %s28 = sphi 0, %s25
      %s29 = sphi 0, %s28
      %s45 = sphi 0, %s29
      %s49 = sphi 0, %s49
      %s51 = sphi 0, %s49
      %s52 = sphi 0, %s51
      %s66 = sphi 0, %s52
      %s70 = sphi 0, %s70
      %s72 = sphi 0, %s70
      %s73 = sphi 0, %s72
      %s87 = sphi 0, %s73
      %s93 = sphi 0, %s95
      %s96 = sphi 0, %s93
      %s97 = sphi 0, %s96
      %s113 = sphi 0, %s97
    $region4: #{tpu_custom_call.1} parent=1 // loop_header_branch
      %18 = sbr.rel (%p16) target = $region8
    $region5: #{tpu_custom_call.1} parent=1 // loop_body
      %s20 = ssub.s32 %s15, 1
      %s21 = ssub.s32 %s15, 2
      %s22 = sadd.s32 %s15, 1
      %s23 = ssub.s32 %s15, %s22
      %p24 = scmp.eq.s32.totalorder %s23, 0
      %s26 = sadd.s32 %s25, 1
      %s27 = scalar_select %p24, %s25, %s26
      %p30 = pneg %p24
      %p31 = scmp.eq.s32.totalorder %s15, 1
      %p32 = por %p30, %p31
      %p33 = scmp.ne.s32.totalorder %s25, %s28
      %p34 = scmp.eq.s32.totalorder %s15, 0
      %p35 = por %p33, %p34
      %p36 = scmp.ne.s32.totalorder %s25, %s28
      %p37 = scmp.eq.s32.totalorder %s20, 1
      %p38 = por %p36, %p37
      %p39 = scmp.ne.s32.totalorder %s28, %s29
      %p40 = scmp.eq.s32.totalorder %s20, 0
      %p41 = por %p39, %p40
      %p42 = scmp.ne.s32.totalorder %s28, %s29
      %p43 = scmp.eq.s32.totalorder %s21, 1
      %p44 = por %p42, %p43
      %p46 = scmp.ne.s32.totalorder %s29, %s45
      %p47 = scmp.eq.s32.totalorder %s21, 0
      %p48 = por %p46, %p47
      %s50 = sadd.s32 %s49, 1
      %p53 = scmp.eq.s32.totalorder %s15, 1
      %p54 = scmp.ne.s32.totalorder %s49, %s51
      %p55 = scmp.eq.s32.totalorder %s15, 0
      %p56 = por %p54, %p55
      %p57 = scmp.ne.s32.totalorder %s49, %s51
      %p58 = scmp.eq.s32.totalorder %s20, 1
      %p59 = por %p57, %p58
      %p60 = scmp.ne.s32.totalorder %s51, %s52
      %p61 = scmp.eq.s32.totalorder %s20, 0
      %p62 = por %p60, %p61
      %p63 = scmp.ne.s32.totalorder %s51, %s52
      %p64 = scmp.eq.s32.totalorder %s21, 1
      %p65 = por %p63, %p64
      %p67 = scmp.ne.s32.totalorder %s52, %s66
      %p68 = scmp.eq.s32.totalorder %s21, 0
      %p69 = por %p67, %p68
      %s71 = sadd.s32 %s70, 1
      %p74 = scmp.eq.s32.totalorder %s15, 1
      %p75 = scmp.ne.s32.totalorder %s70, %s72
      %p76 = scmp.eq.s32.totalorder %s15, 0
      %p77 = por %p75, %p76
      %p78 = scmp.ne.s32.totalorder %s70, %s72
      %p79 = scmp.eq.s32.totalorder %s20, 1
      %p80 = por %p78, %p79
      %p81 = scmp.ne.s32.totalorder %s72, %s73
      %p82 = scmp.eq.s32.totalorder %s20, 0
      %p83 = por %p81, %p82
      %p84 = scmp.ne.s32.totalorder %s72, %s73
      %p85 = scmp.eq.s32.totalorder %s21, 1
      %p86 = por %p84, %p85
      %p88 = scmp.ne.s32.totalorder %s73, %s87
      %p89 = scmp.eq.s32.totalorder %s21, 0
      %p90 = por %p88, %p89
      %s91 = ssub.s32 %s15, %s22
      %p92 = scmp.eq.s32.totalorder %s91, 0
      %s94 = sadd.s32 %s93, 1
      %s95 = scalar_select %p92, %s93, %s94
      %p98 = pneg %p92
      %p99 = scmp.eq.s32.totalorder %s15, 1
      %p100 = por %p98, %p99
      %p101 = scmp.ne.s32.totalorder %s93, %s96
      %p102 = scmp.eq.s32.totalorder %s15, 0
      %p103 = por %p101, %p102
      %p104 = scmp.ne.s32.totalorder %s93, %s96
      %p105 = scmp.eq.s32.totalorder %s20, 1
      %p106 = por %p104, %p105
      %p107 = scmp.ne.s32.totalorder %s96, %s97
      %p108 = scmp.eq.s32.totalorder %s20, 0
      %p109 = por %p107, %p108
      %p110 = scmp.ne.s32.totalorder %s96, %s97
      %p111 = scmp.eq.s32.totalorder %s21, 1
      %p112 = por %p110, %p111
      %p114 = scmp.ne.s32.totalorder %s97, %s113
      %p115 = scmp.eq.s32.totalorder %s21, 0
      %p116 = por %p114, %p115
      %p117 = scmp.le.s32.totalorder 1, %s15
      %p118 = scmp.lt.s32.totalorder %s15, 3
      %p119 = pnand %p117, %p118
      %p120 = pneg %p119
      // Predicated region
      $region9: #{tpu_custom_call.1} parent=5 // pred_check
        _
      $region10: #{tpu_custom_call.1} parent=5 // pred_check_branch
        %122 = sbr.rel (%p119) target = $region12
      $region11: #{tpu_custom_call.1} parent=5 // pred_region
        %s123 = ssub.s32 %s15, 1
        // Predicated region
        $region13: #{tpu_custom_call.1} parent=11 // pred_check
          %p124 = pneg %p62
        $region14: #{tpu_custom_call.1} parent=11 // pred_check_branch
          %126 = sbr.rel (%p124) target = $region16
        $region15: #{tpu_custom_call.1} parent=11 // pred_region
          _
        $region16: #{tpu_custom_call.1} parent=11 // pred_fallthru
          _
        // Predicated region
        $region17: #{tpu_custom_call.1} parent=11 // pred_check
          %p127 = pneg %p83
        $region18: #{tpu_custom_call.1} parent=11 // pred_check_branch
          %129 = sbr.rel (%p127) target = $region20
        $region19: #{tpu_custom_call.1} parent=11 // pred_region
          _
        $region20: #{tpu_custom_call.1} parent=11 // pred_fallthru
          _
      $region12: #{tpu_custom_call.1} parent=5 // pred_fallthru
        _
      %p130 = scmp.lt.s32.totalorder %s15, 2
      // Predicated region
      $region21: #{tpu_custom_call.1} parent=5 // pred_check
        %p131 = pneg %p130
      $region22: #{tpu_custom_call.1} parent=5 // pred_check_branch
        %133 = sbr.rel (%p131) target = $region24
      $region23: #{tpu_custom_call.1} parent=5 // pred_region
        // Predicated region
        $region25: #{tpu_custom_call.1} parent=23 // pred_check
          %p134 = pneg %p35
        $region26: #{tpu_custom_call.1} parent=23 // pred_check_branch
          %136 = sbr.rel (%p134) target = $region28
        $region27: #{tpu_custom_call.1} parent=23 // pred_region
          %s137 = sand.u32 %s25, 1
          %s138 = scalar_lea.sflag [#allocation3], %s137
          %s139 = sand.u32 %s25, 1
          %s140 = smul.addr %s139, 128
          %s141 = scalar_lea.vmem [#allocation2], %s140
          %s142 = smul.u32 2, %s15
          %s144 = ssub.s32 2048, 2048
          %145 = vsyncadd %s138, %s144
          %s146 = smul.addr %s142, 8
          %s147 = smul.addr %s146, 128
          %s148 = scalar_lea.hbm %s0, %s147
          %s149 = sshll.u32 %s141, 4
          %s150 = int_to_ptr.vmem [resolvable:$true] %s149
          %155 = dma.hbm_to_vmem [thread:$0]  %s148, 2048, %s150, %s138, 256, 256, 16
        $region28: #{tpu_custom_call.1} parent=23 // pred_fallthru
          _
      $region24: #{tpu_custom_call.1} parent=5 // pred_fallthru
        _
      %p156 = scmp.le.s32.totalorder 1, %s15
      %p157 = scmp.lt.s32.totalorder %s15, 3
      %p158 = pnand %p156, %p157
      %p159 = pneg %p158
      // Predicated region
      $region29: #{tpu_custom_call.1} parent=5 // pred_check
        _
      $region30: #{tpu_custom_call.1} parent=5 // pred_check_branch
        %161 = sbr.rel (%p158) target = $region32
      $region31: #{tpu_custom_call.1} parent=5 // pred_region
        %s162 = ssub.s32 %s15, 1
        %s163 = sand.u32 %s28, 1
        %s164 = scalar_lea.sflag [#allocation3], %s163
        %s165 = sand.u32 %s28, 1
        %s166 = smul.addr %s165, 128
        %s167 = scalar_lea.vmem [#allocation2], %s166
        // Predicated region
        $region33: #{tpu_custom_call.1} parent=31 // pred_check
          %p168 = pneg %p41
        $region34: #{tpu_custom_call.1} parent=31 // pred_check_branch
          %170 = sbr.rel (%p168) target = $region36
        $region35: #{tpu_custom_call.1} parent=31 // pred_region
          %171 = dma.done %s164, 2048
        $region36: #{tpu_custom_call.1} parent=31 // pred_fallthru
          _
        %s172 = sand.u32 %s28, 1
        %s173 = scalar_lea.sflag [#allocation3], %s172
        %s174 = sand.u32 %s28, 1
        %s175 = smul.addr %s174, 128
        %s176 = scalar_lea.vmem [#allocation2], %s175
        %p177 = pneg %p41
        %p178 = pneg %p38
        %p179 = pneg %p62
        %p180 = pneg %p59
        %p181 = pneg %p83
        %p182 = pneg %p80
        %p183 = pneg %p109
        %p184 = pneg %p106
        %s185 = sand.u32 %s96, 1
        %s186 = scalar_lea.sflag [#allocation4], %s185
        %s187 = sand.u32 %s96, 1
        %s188 = smul.addr %s187, 128
        %s189 = scalar_lea.vmem [#allocation5], %s188
        %s190 = smul.u32 2, %s20
        %s191 = smul.u32 2, %s20
        %v192 = vld [vmem:[%s167] sm:$0xff]
        %v193 = vld [vmem:[%s167 + $0x8] sm:$0xff]
        %v194 = vld [vmem:[%s167 + $0x10] sm:$0xff]
        %v195 = vld [vmem:[%s167 + $0x18] sm:$0xff]
        %v196 = vld [vmem:[%s167 + $0x20] sm:$0xff]
        %v197 = vld [vmem:[%s167 + $0x28] sm:$0xff]
        %v198 = vld [vmem:[%s167 + $0x30] sm:$0xff]
        %v199 = vld [vmem:[%s167 + $0x38] sm:$0xff]
        %v200 = vld [vmem:[%s167 + $0x40] sm:$0xff]
        %v201 = vld [vmem:[%s167 + $0x48] sm:$0xff]
        %v202 = vld [vmem:[%s167 + $0x50] sm:$0xff]
        %v203 = vld [vmem:[%s167 + $0x58] sm:$0xff]
        %v204 = vld [vmem:[%s167 + $0x60] sm:$0xff]
        %v205 = vld [vmem:[%s167 + $0x68] sm:$0xff]
        %v206 = vld [vmem:[%s167 + $0x70] sm:$0xff]
        %v207 = vld [vmem:[%s167 + $0x78] sm:$0xff]
        %v208 = vadd.f32 %v192, %v193
        %209 = vadd.xlane.f32.xlu0 %v208
        %v210 = vpop.xlane.xlu0 %209
        %v211 = vadd.f32 %v194, %v195
        %212 = vadd.xlane.f32.xlu0 %v211
        %v213 = vpop.xlane.xlu0 %212
        %v214 = vadd.f32 %v196, %v197
        %215 = vadd.xlane.f32.xlu0 %v214
        %v216 = vpop.xlane.xlu0 %215
        %v217 = vadd.f32 %v198, %v199
        %218 = vadd.xlane.f32.xlu0 %v217
        %v219 = vpop.xlane.xlu0 %218
        %v220 = vadd.f32 %v200, %v201
        %221 = vadd.xlane.f32.xlu0 %v220
        %v222 = vpop.xlane.xlu0 %221
        %v223 = vadd.f32 %v202, %v203
        %224 = vadd.xlane.f32.xlu0 %v223
        %v225 = vpop.xlane.xlu0 %224
        %v226 = vadd.f32 %v204, %v205
        %227 = vadd.xlane.f32.xlu0 %v226
        %v228 = vpop.xlane.xlu0 %227
        %v229 = vadd.f32 %v206, %v207
        %230 = vadd.xlane.f32.xlu0 %v229
        %v231 = vpop.xlane.xlu0 %230
        %v232 = vmul.f32 %v210, 0.00390625
        %v233 = vmul.f32 %v213, 0.00390625
        %v234 = vmul.f32 %v216, 0.00390625
        %v235 = vmul.f32 %v219, 0.00390625
        %v236 = vmul.f32 %v222, 0.00390625
        %v237 = vmul.f32 %v225, 0.00390625
        %v238 = vmul.f32 %v228, 0.00390625
        %v239 = vmul.f32 %v231, 0.00390625
        %v240 = vld [vmem:[%s1] sm:$0x3]
        %v249 = vlaneseq
        %v250 = vand.u32 %v249, 127
        %v251 = vlaneseq
        %v252 = vshrl.u32 %v251, 7
        %v253 = vsub.s32 %v250, %v252
        %v254 = vrot.slane %v232, %v253
        %v255 = vadd.s32 %v250, 4294967288
        %v256 = vlaneseq
        %v257 = vshrl.u32 %v256, 7
        %v258 = vsub.s32 %v255, %v257
        %v259 = vrot.slane %v233, %v258
        %vm260 = vcmask 130112
        %v261 = vsel %vm260, %v259, %v254
        %v262 = vadd.s32 %v250, 4294967280
        %v263 = vlaneseq
        %v264 = vshrl.u32 %v263, 7
        %v265 = vsub.s32 %v262, %v264
        %v266 = vrot.slane %v234, %v265
        %vm267 = vcmask 195712
        %v268 = vsel %vm267, %v266, %v261
        %v269 = vadd.s32 %v250, 4294967272
        %v270 = vlaneseq
        %v271 = vshrl.u32 %v270, 7
        %v272 = vsub.s32 %v269, %v271
        %v273 = vrot.slane %v235, %v272
        %vm274 = vcmask 261312
        %v275 = vsel %vm274, %v273, %v268
        %v276 = vlaneseq
        %v277 = vshrl.u32 %v276, 7
        %v278 = vsub.s32 %v250, %v277
        %v279 = vrot.slane %v236, %v278
        %v280 = vlaneseq
        %v281 = vshrl.u32 %v280, 7
        %v282 = vsub.s32 %v255, %v281
        %v283 = vrot.slane %v237, %v282
        %v284 = vsel %vm260, %v283, %v279
        %v285 = vlaneseq
        %v286 = vshrl.u32 %v285, 7
        %v287 = vsub.s32 %v262, %v286
        %v288 = vrot.slane %v238, %v287
        %v289 = vsel %vm267, %v288, %v284
        %v290 = vlaneseq
        %v291 = vshrl.u32 %v290, 7
        %v292 = vsub.s32 %v269, %v291
        %v293 = vrot.slane %v239, %v292
        %v294 = vsel %vm274, %v293, %v289
        %vm295 = vcmask 1041409
        %v296 = vsel %vm295, %v294, %v275
        %vm297 = vcmask 261120
        %v298 = vsel %vm297, %v296, 0
        %v301 = vsel %vm297, %v240, 0
        %303 = vmatprep.subr.mxu0 0.0
        %304 = vmatpush1.xpose.msra.mxu0 0.0
        %305 = vmatprep.subr.mxu0 0.0
        %306 = vmatpush1.xpose.msra.mxu0 0.0
        %307 = vmatprep.subr.mxu0 0.0
        %308 = vmatpush1.xpose.msra.mxu0 0.0
        %309 = vmatprep.subr.mxu0 0.0
        %310 = vmatpush1.xpose.msra.mxu0 0.0
        %311 = vmatprep.subr.mxu0 0.0
        %312 = vmatpush1.xpose.msra.mxu0 0.0
        %313 = vmatprep.subr.mxu0 0.0
        %314 = vmatpush1.xpose.msra.mxu0 0.0
        %315 = vmatprep.subr.mxu0 0.0
        %316 = vmatpush1.xpose.msra.mxu0 0.0
        %317 = vmatprep.subr.mxu0 0.0
        %318 = vmatpush1.xpose.msra.mxu0 0.0
        %319 = vmatprep.subr.mxu0 0.0
        %320 = vmatpush1.xpose.msra.mxu0 0.0
        %321 = vmatprep.subr.mxu0 0.0
        %322 = vmatpush1.xpose.msra.mxu0 0.0
        %323 = vmatprep.subr.mxu0 0.0
        %324 = vmatpush1.xpose.msra.mxu0 0.0
        %325 = vmatprep.subr.mxu0 0.0
        %326 = vmatpush1.xpose.msra.mxu0 0.0
        %327 = vmatprep.subr.mxu0 0.0
        %328 = vmatpush1.xpose.msra.mxu0 0.0
        %329 = vmatprep.subr.mxu0 0.0
        %330 = vmatpush1.xpose.msra.mxu0 0.0
        %331 = vmatprep.subr.mxu0 0.0
        %332 = vmatpush1.xpose.msra.mxu0 0.0
        %333 = vmatprep.subr.mxu0 0.0
        %334 = vmatpush1.xpose.msra.mxu0 %v301
        %335 = vmatprep.subr.mxu0 0.0
        %336 = vmatpush2.xpose.msra.mxu0 0.0
        %337 = vmatprep.subr.mxu0 0.0
        %338 = vmatpush2.xpose.msra.mxu0 0.0
        %339 = vmatprep.subr.mxu0 0.0
        %340 = vmatpush2.xpose.msra.mxu0 0.0
        %341 = vmatprep.subr.mxu0 0.0
        %342 = vmatpush2.xpose.msra.mxu0 0.0
        %343 = vmatprep.subr.mxu0 0.0
        %344 = vmatpush2.xpose.msra.mxu0 0.0
        %345 = vmatprep.subr.mxu0 0.0
        %346 = vmatpush2.xpose.msra.mxu0 0.0
        %347 = vmatprep.subr.mxu0 0.0
        %348 = vmatpush2.xpose.msra.mxu0 0.0
        %349 = vmatprep.subr.mxu0 0.0
        %350 = vmatpush2.xpose.msra.mxu0 0.0
        %351 = vmatprep.subr.mxu0 0.0
        %352 = vmatpush2.xpose.msra.mxu0 0.0
        %353 = vmatprep.subr.mxu0 0.0
        %354 = vmatpush2.xpose.msra.mxu0 0.0
        %355 = vmatprep.subr.mxu0 0.0
        %356 = vmatpush2.xpose.msra.mxu0 0.0
        %357 = vmatprep.subr.mxu0 0.0
        %358 = vmatpush2.xpose.msra.mxu0 0.0
        %359 = vmatprep.subr.mxu0 0.0
        %360 = vmatpush2.xpose.msra.mxu0 0.0
        %361 = vmatprep.subr.mxu0 0.0
        %362 = vmatpush2.xpose.msra.mxu0 0.0
        %363 = vmatprep.subr.mxu0 0.0
        %364 = vmatpush2.xpose.msra.mxu0 0.0
        %365 = vmatprep.subr.mxu0 0.0
        %366 = vmatpush2.xpose.msra.mxu0 0.0
        %367 = vmatprep.mubr.f32.mxu0 0.0
        %368 = vmatmul.mubr.f32.gmra.mxu0 %v298
        %v369 = vpop.f32.mrf.mxu0
        %v370 = vadd.f32 0.0, %v369
        %v371 = vpop.f32.mrf.mxu0
        %372 = vdwg.mxu0
        %v373 = vmax.f32 %v370, 0.0
        %v374 = vld [vmem:[%s2] sm:$0xff]
        %v375 = vld [vmem:[%s2 + $0x8] sm:$0xff]
        %v376 = vld [vmem:[%s2 + $0x10] sm:$0xff]
        %v377 = vld [vmem:[%s2 + $0x18] sm:$0xff]
        %vm378 = vcmask 15360
        %v380 = vsel %vm378, %v373, 0
        %v383 = vsel %vm378, %v374, 0
        %v386 = vsel %vm378, %v375, 0
        %v389 = vsel %vm378, %v376, 0
        %v392 = vsel %vm378, %v377, 0
        %394 = vmatprep.subr.mxu0 0.0
        %395 = vmatpush1.xpose.msra.mxu0 0.0
        %396 = vmatprep.subr.mxu0 0.0
        %397 = vmatpush1.xpose.msra.mxu0 0.0
        %398 = vmatprep.subr.mxu0 0.0
        %399 = vmatpush1.xpose.msra.mxu0 0.0
        %400 = vmatprep.subr.mxu0 0.0
        %401 = vmatpush1.xpose.msra.mxu0 0.0
        %402 = vmatprep.subr.mxu0 0.0
        %403 = vmatpush1.xpose.msra.mxu0 0.0
        %404 = vmatprep.subr.mxu0 0.0
        %405 = vmatpush1.xpose.msra.mxu0 0.0
        %406 = vmatprep.subr.mxu0 0.0
        %407 = vmatpush1.xpose.msra.mxu0 0.0
        %408 = vmatprep.subr.mxu0 0.0
        %409 = vmatpush1.xpose.msra.mxu0 0.0
        %410 = vmatprep.subr.mxu0 0.0
        %411 = vmatpush1.xpose.msra.mxu0 0.0
        %412 = vmatprep.subr.mxu0 0.0
        %413 = vmatpush1.xpose.msra.mxu0 0.0
        %414 = vmatprep.subr.mxu0 0.0
        %415 = vmatpush1.xpose.msra.mxu0 0.0
        %416 = vmatprep.subr.mxu0 0.0
        %417 = vmatpush1.xpose.msra.mxu0 0.0
        %418 = vmatprep.subr.mxu0 0.0
        %419 = vmatpush1.xpose.msra.mxu0 %v392
        %420 = vmatprep.subr.mxu0 0.0
        %421 = vmatpush1.xpose.msra.mxu0 %v389
        %422 = vmatprep.subr.mxu0 0.0
        %423 = vmatpush1.xpose.msra.mxu0 %v386
        %424 = vmatprep.subr.mxu0 0.0
        %425 = vmatpush1.xpose.msra.mxu0 %v383
        %426 = vmatprep.subr.mxu0 0.0
        %427 = vmatpush2.xpose.msra.mxu0 0.0
        %428 = vmatprep.subr.mxu0 0.0
        %429 = vmatpush2.xpose.msra.mxu0 0.0
        %430 = vmatprep.subr.mxu0 0.0
        %431 = vmatpush2.xpose.msra.mxu0 0.0
        %432 = vmatprep.subr.mxu0 0.0
        %433 = vmatpush2.xpose.msra.mxu0 0.0
        %434 = vmatprep.subr.mxu0 0.0
        %435 = vmatpush2.xpose.msra.mxu0 0.0
        %436 = vmatprep.subr.mxu0 0.0
        %437 = vmatpush2.xpose.msra.mxu0 0.0
        %438 = vmatprep.subr.mxu0 0.0
        %439 = vmatpush2.xpose.msra.mxu0 0.0
        %440 = vmatprep.subr.mxu0 0.0
        %441 = vmatpush2.xpose.msra.mxu0 0.0
        %442 = vmatprep.subr.mxu0 0.0
        %443 = vmatpush2.xpose.msra.mxu0 0.0
        %444 = vmatprep.subr.mxu0 0.0
        %445 = vmatpush2.xpose.msra.mxu0 0.0
        %446 = vmatprep.subr.mxu0 0.0
        %447 = vmatpush2.xpose.msra.mxu0 0.0
        %448 = vmatprep.subr.mxu0 0.0
        %449 = vmatpush2.xpose.msra.mxu0 0.0
        %450 = vmatprep.subr.mxu0 0.0
        %451 = vmatpush2.xpose.msra.mxu0 0.0
        %452 = vmatprep.subr.mxu0 0.0
        %453 = vmatpush2.xpose.msra.mxu0 0.0
        %454 = vmatprep.subr.mxu0 0.0
        %455 = vmatpush2.xpose.msra.mxu0 0.0
        %456 = vmatprep.subr.mxu0 0.0
        %457 = vmatpush2.xpose.msra.mxu0 0.0
        %458 = vmatprep.mubr.f32.mxu0 0.0
        %459 = vmatmul.mubr.f32.gmra.mxu0 %v380
        %v460 = vpop.f32.mrf.mxu0
        %v461 = vadd.f32 0.0, %v460
        %v462 = vpop.f32.mrf.mxu0
        %463 = vdwg.mxu0
        %v464 = vxor.u32 %v461, 2147483648
        %v465 = vmul.f32 %v464, 1.442695
        %v466 = vpow.pop %v465
        %v467 = vadd.f32 %v466, 1.0
        %v468 = vrcp.pop %v467
        %v469 = vmul.f32 1.0, %v468
        %v470 = vlaneseq
        %v471 = vshrl.u32 %v470, 7
        %v472 = vsub.s32 0, %v471
        %v473 = vrot.slane %v469, %v472
        %475 = vbcast.lane.b32.xlu0 %v473, 256
        %v476 = vpop.permute.xlu0 %475
        %s478 = sor.u32 256, 8
        %479 = vbcast.lane.b32.xlu0 %v473, %s478
        %v480 = vpop.permute.xlu0 %479
        %s482 = sor.u32 256, 16
        %483 = vbcast.lane.b32.xlu0 %v473, %s482
        %v484 = vpop.permute.xlu0 %483
        %s486 = sor.u32 256, 24
        %487 = vbcast.lane.b32.xlu0 %v473, %s486
        %v488 = vpop.permute.xlu0 %487
        %v489 = vlaneseq
        %v490 = vshrl.u32 %v489, 7
        %v491 = vsub.s32 1, %v490
        %v492 = vrot.slane %v469, %v491
        %494 = vbcast.lane.b32.xlu0 %v492, 256
        %v495 = vpop.permute.xlu0 %494
        %s497 = sor.u32 256, 8
        %498 = vbcast.lane.b32.xlu0 %v492, %s497
        %v499 = vpop.permute.xlu0 %498
        %s501 = sor.u32 256, 16
        %502 = vbcast.lane.b32.xlu0 %v492, %s501
        %v503 = vpop.permute.xlu0 %502
        %s505 = sor.u32 256, 24
        %506 = vbcast.lane.b32.xlu0 %v492, %s505
        %v507 = vpop.permute.xlu0 %506
        %v508 = vmul.f32 %v192, %v476
        %v509 = vmul.f32 %v193, %v476
        %v510 = vmul.f32 %v194, %v480
        %v511 = vmul.f32 %v195, %v480
        %v512 = vmul.f32 %v196, %v484
        %v513 = vmul.f32 %v197, %v484
        %v514 = vmul.f32 %v198, %v488
        %v515 = vmul.f32 %v199, %v488
        %v516 = vmul.f32 %v200, %v495
        %v517 = vmul.f32 %v201, %v495
        %v518 = vmul.f32 %v202, %v499
        %v519 = vmul.f32 %v203, %v499
        %v520 = vmul.f32 %v204, %v503
        %v521 = vmul.f32 %v205, %v503
        %v522 = vmul.f32 %v206, %v507
        %v523 = vmul.f32 %v207, %v507
        %524 = vst [vmem:[%s189] sm:$0xff] %v508
        %525 = vst [vmem:[%s189 + $0x8] sm:$0xff] %v509
        %526 = vst [vmem:[%s189 + $0x10] sm:$0xff] %v510
        %527 = vst [vmem:[%s189 + $0x18] sm:$0xff] %v511
        %528 = vst [vmem:[%s189 + $0x20] sm:$0xff] %v512
        %529 = vst [vmem:[%s189 + $0x28] sm:$0xff] %v513
        %530 = vst [vmem:[%s189 + $0x30] sm:$0xff] %v514
        %531 = vst [vmem:[%s189 + $0x38] sm:$0xff] %v515
        %532 = vst [vmem:[%s189 + $0x40] sm:$0xff] %v516
        %533 = vst [vmem:[%s189 + $0x48] sm:$0xff] %v517
        %534 = vst [vmem:[%s189 + $0x50] sm:$0xff] %v518
        %535 = vst [vmem:[%s189 + $0x58] sm:$0xff] %v519
        %536 = vst [vmem:[%s189 + $0x60] sm:$0xff] %v520
        %537 = vst [vmem:[%s189 + $0x68] sm:$0xff] %v521
        %538 = vst [vmem:[%s189 + $0x70] sm:$0xff] %v522
        %539 = vst [vmem:[%s189 + $0x78] sm:$0xff] %v523
        %s540 = sand.u32 %s96, 1
        %s541 = scalar_lea.sflag [#allocation4], %s540
        %s542 = sand.u32 %s96, 1
        %s543 = smul.addr %s542, 128
        %s544 = scalar_lea.vmem [#allocation5], %s543
        // Predicated region
        $region37: #{tpu_custom_call.1} parent=31 // pred_check
          %p545 = pneg %p106
        $region38: #{tpu_custom_call.1} parent=31 // pred_check_branch
          %547 = sbr.rel (%p545) target = $region40
        $region39: #{tpu_custom_call.1} parent=31 // pred_region
          %s548 = smul.u32 2, %s20
          %s550 = ssub.s32 2048, 2048
          %551 = vsyncadd %s541, %s550
          %s552 = smul.addr %s548, 8
          %s553 = smul.addr %s552, 128
          %s554 = scalar_lea.hbm %s3, %s553
          %s555 = sshll.u32 %s544, 4
          %s556 = int_to_ptr.vmem [resolvable:$true] %s555
          %561 = dma.vmem_to_hbm [thread:$0]  %s556, 2048, %s554, %s541, 256, 256, 16
        $region40: #{tpu_custom_call.1} parent=31 // pred_fallthru
          _
      $region32: #{tpu_custom_call.1} parent=5 // pred_fallthru
        _
      %p562 = scmp.le.s32.totalorder 2, %s15
      // Predicated region
      $region41: #{tpu_custom_call.1} parent=5 // pred_check
        %p563 = pneg %p562
      $region42: #{tpu_custom_call.1} parent=5 // pred_check_branch
        %565 = sbr.rel (%p563) target = $region44
      $region43: #{tpu_custom_call.1} parent=5 // pred_region
        %s566 = ssub.s32 %s15, 2
        // Predicated region
        $region45: #{tpu_custom_call.1} parent=43 // pred_check
          %p567 = pneg %p112
        $region46: #{tpu_custom_call.1} parent=43 // pred_check_branch
          %569 = sbr.rel (%p567) target = $region48
        $region47: #{tpu_custom_call.1} parent=43 // pred_region
          %s570 = sand.u32 %s97, 1
          %s571 = scalar_lea.sflag [#allocation4], %s570
          %s572 = sand.u32 %s97, 1
          %s573 = smul.addr %s572, 128
          %s574 = scalar_lea.vmem [#allocation5], %s573
          %575 = dma.done %s571, 2048
        $region48: #{tpu_custom_call.1} parent=43 // pred_fallthru
          _
      $region44: #{tpu_custom_call.1} parent=5 // pred_fallthru
        _
    $region6: #{tpu_custom_call.1} parent=1 // loop_footer
      %s19 = sadd.s32 1, %s15
    $region7: #{tpu_custom_call.1} parent=1 // loop_footer_branch
      %14 = sbr.rel target = $region3
    $region8: #{tpu_custom_call.1} parent=1 // loop_exit
      _
    %576 = vsyncpa [#allocation3], 1
    %s577 = scalar_lea.sflag [#allocation3], 1
    %578 = vsyncpa %s577, 1
    %579 = vsyncpa [#allocation4], 1
    %s580 = scalar_lea.sflag [#allocation4], 1
    %581 = vsyncpa %s580, 1

</llo_original>
